<compile_context>
chip_gen: v7x
topology: tpu7x:2x2x1
jax: 0.10.0
libtpu: 0.0.40
codegen_flags: <defaults>
</compile_context>

<pallas_src>
import functools

import jax
import jax.numpy as jnp
from jax.experimental import pallas as pl
from jax.experimental.pallas import tpu as pltpu


TC_DEFAULT = 16   # timesteps per grid step (16 => bf16-input blocks are (16,128)-tile aligned)


# ---------------------------------------------------------------------------
# Kernels
# ---------------------------------------------------------------------------
def _gru_step(x, h, wgx_ref, wgh_ref, bgx_ref, bgh_ref):
    """One GRU-cell step.  x: (1,Hp) bf16, h: (1,Hp) f32 carry.  Returns new h (f32)."""
    Hp = h.shape[-1]
    # gi = x @ W_ih + b_ih   [r|z|n],  gh = h @ W_hh + b_hh   [r|z|n]   (f32 accumulation)
    gi = jnp.dot(x, wgx_ref[...], preferred_element_type=jnp.float32) + bgx_ref[...]
    gh = jnp.dot(h.astype(wgh_ref.dtype), wgh_ref[...],
                 preferred_element_type=jnp.float32) + bgh_ref[...]
    r = jax.nn.sigmoid(gi[:, 0 * Hp:1 * Hp] + gh[:, 0 * Hp:1 * Hp])
    z = jax.nn.sigmoid(gi[:, 1 * Hp:2 * Hp] + gh[:, 1 * Hp:2 * Hp])
    n = jnp.tanh(gi[:, 2 * Hp:3 * Hp] + r * gh[:, 2 * Hp:3 * Hp])
    return (1.0 - z) * n + z * h


def _hidden_kernel(x_ref, h0_ref, wgx_ref, wgh_ref, bgx_ref, bgh_ref, out_ref, h_scr):
    """split=False path: Tc GRU steps per grid step; projection weights never loaded."""
    Tc, _ = x_ref.shape

    @pl.when(pl.program_id(0) == 0)
    def _():
        h_scr[...] = h0_ref[...].astype(jnp.float32)

    h = h_scr[...]                                   # (1, Hp) f32 recurrent carry
    for t in range(Tc):                              # static chunk loop (fully unrolled)
        x = x_ref[t:t + 1, :]                        # (1, Hp) bf16
        h = _gru_step(x, h, wgx_ref, wgh_ref, bgx_ref, bgh_ref)
        out_ref[t:t + 1, :] = h.astype(out_ref.dtype)
    h_scr[...] = h


def _split_kernel(x_ref, h0_ref, wgx_ref, wgh_ref, bgx_ref, bgh_ref,
                  w3_ref, b3_ref, w1_ref, b1_ref, w2_ref, b2_ref,
                  out_ref, h_scr):
    """split=True path: GRU step + relu(W3) + relu(W1)/relu(W2).

    Output slab layout per row: [ hidden | cluster1 | cluster2 ]  (3*Hp lanes).
    """
    Tc, Hp = x_ref.shape
    wdt = wgx_ref.dtype

    @pl.when(pl.program_id(0) == 0)
    def _():
        h_scr[...] = h0_ref[...].astype(jnp.float32)

    h = h_scr[...]
    for t in range(Tc):
        x = x_ref[t:t + 1, :]
        h = _gru_step(x, h, wgx_ref, wgh_ref, bgx_ref, bgh_ref)

        # extended_embedding = relu(W3 @ embedding)            (1, 2Hp)
        ext = jnp.dot(h.astype(wdt), w3_ref[...],
                      preferred_element_type=jnp.float32) + b3_ref[...]
        ext = jnp.maximum(ext, 0.0)

        # cluster1 / cluster2: two independent (1,Hp)x(Hp,Hp) matmuls on the
        # lane-aligned halves of ext (no block-diagonal zero padding).
        c1 = jnp.dot(ext[:, :Hp].astype(wdt), w1_ref[...],
                     preferred_element_type=jnp.float32) + b1_ref[...]
        c2 = jnp.dot(ext[:, Hp:].astype(wdt), w2_ref[...],
                     preferred_element_type=jnp.float32) + b2_ref[...]

        out_ref[t:t + 1, 0 * Hp:1 * Hp] = h.astype(out_ref.dtype)
        out_ref[t:t + 1, 1 * Hp:2 * Hp] = jnp.maximum(c1, 0.0).astype(out_ref.dtype)
        out_ref[t:t + 1, 2 * Hp:3 * Hp] = jnp.maximum(c2, 0.0).astype(out_ref.dtype)
    h_scr[...] = h


# ---------------------------------------------------------------------------
# pallas_call wrapper
# ---------------------------------------------------------------------------
@functools.partial(jax.jit, static_argnames=("split",))
def _decoder_pallas(words, h0, packed, split):
    """T-step decode.  words: (T, Hp) bf16, h0: (1, Hp) f32.  Weights stay in VMEM."""
    T, Hp = words.shape
    Tc = min(TC_DEFAULT, T)
    T_pad = ((T + Tc - 1) // Tc) * Tc
    if T_pad != T:
        # Extra zero timesteps only advance the (discarded) carry; outputs are sliced to T.
        words = jnp.pad(words, ((0, T_pad - T), (0, 0)))
    n_chunks = T_pad // Tc

    def const_spec(a):                      # whole array, resident across the grid
        return pl.BlockSpec(a.shape, lambda c: (0, 0))

    x_spec = pl.BlockSpec((Tc, Hp), lambda c: (c, 0))

    if split:
        kernel = _split_kernel
        weights = (packed["w_gx"], packed["w_gh"], packed["b_gx"], packed["b_gh"],
                   packed["w3"], packed["b3"], packed["w1"], packed["b1"],
                   packed["w2"], packed["b2"])
        out_shape = jax.ShapeDtypeStruct((T_pad, 3 * Hp), jnp.float32)
        out_specs = pl.BlockSpec((Tc, 3 * Hp), lambda c: (c, 0))
    else:
        kernel = _hidden_kernel
        weights = (packed["w_gx"], packed["w_gh"], packed["b_gx"], packed["b_gh"])
        out_shape = jax.ShapeDtypeStruct((T_pad, Hp), jnp.float32)
        out_specs = pl.BlockSpec((Tc, Hp), lambda c: (c, 0))

    grid_spec = pltpu.PrefetchScalarGridSpec(
        num_scalar_prefetch=0,
        grid=(n_chunks,),
        in_specs=[x_spec, const_spec(h0)] + [const_spec(w) for w in weights],
        out_specs=out_specs,
        scratch_shapes=[pltpu.VMEM((1, Hp), jnp.float32)],   # recurrent hidden carry
    )
    out = pl.pallas_call(
        kernel,
        out_shape=out_shape,
        grid_spec=grid_spec,
        compiler_params=pltpu.CompilerParams(
            dimension_semantics=("arbitrary",),   # sequential recurrence over chunks
            # bf16 weights ~3 MiB @ H=384, x2 default buffering, + tiny chunk blocks:
            # comfortably below the 32 MiB scoped limit on v5e/v6e/v7x.
            vmem_limit_bytes=32 << 20,
        ),
    )(words, h0, *weights)
    return out[:T]


# ---------------------------------------------------------------------------
# Parameter handling
# ---------------------------------------------------------------------------
def init_params(key, hidden_size):
    """Logical parameters, stored transposed w.r.t. PyTorch: (in_features, out_features)."""
    H = hidden_size
    k = jax.random.split(key, 10)
    s = 1.0 / jnp.sqrt(H)
    u = lambda kk, shape: jax.random.uniform(kk, shape, jnp.float32, -s, s)
    return {
        # nn.GRU: gate order (r, z, n)
        "w_ih": u(k[0], (H, 3 * H)), "w_hh": u(k[1], (H, 3 * H)),
        "b_ih": u(k[2], (1, 3 * H)), "b_hh": u(k[3], (1, 3 * H)),
        # W3: Linear(H, 2H); W1/W2: Linear(H, H)
        "w3": u(k[4], (H, 2 * H)), "b3": u(k[5], (1, 2 * H)),
        "w1": u(k[6], (H, H)), "b1": u(k[7], (1, H)),
        "w2": u(k[8], (H, H)), "b2": u(k[9], (1, H)),
    }


def pack_params(raw, hidden_size):
    """Lane-pad / bf16-cast logical params into the kernel layout (no zero blocks)."""
    H = hidden_size
    Hp = 128 * pl.cdiv(H, 128)              # lane-align (e.g. 300 -> 384)
    wdt = jnp.bfloat16

    pad_w = lambda w: jnp.pad(w, ((0, Hp - H), (0, Hp - H)))     # (H,H) -> (Hp,Hp)
    pad_b = lambda b: jnp.pad(b, ((0, 0), (0, Hp - H)))          # (1,H) -> (1,Hp)

    gates_w = lambda w: jnp.concatenate(
        [pad_w(w[:, i * H:(i + 1) * H]) for i in range(3)], axis=1)   # (Hp, 3Hp)
    gates_b = lambda b: jnp.concatenate(
        [pad_b(b[:, i * H:(i + 1) * H]) for i in range(3)], axis=1)   # (1, 3Hp)

    # W3: the two cluster halves padded independently so the split stays at lane Hp
    w3 = jnp.concatenate([pad_w(raw["w3"][:, :H]), pad_w(raw["w3"][:, H:])], axis=1)
    b3 = jnp.concatenate([pad_b(raw["b3"][:, :H]), pad_b(raw["b3"][:, H:])], axis=1)

    return {
        "w_gx": gates_w(raw["w_ih"]).astype(wdt), "b_gx": gates_b(raw["b_ih"]),
        "w_gh": gates_w(raw["w_hh"]).astype(wdt), "b_gh": gates_b(raw["b_hh"]),
        "w3": w3.astype(wdt), "b3": b3,
        "w1": pad_w(raw["w1"]).astype(wdt), "b1": pad_b(raw["b1"]),
        "w2": pad_w(raw["w2"]).astype(wdt), "b2": pad_b(raw["b2"]),
    }


# ---------------------------------------------------------------------------
# User-facing wrappers
# ---------------------------------------------------------------------------
def decoder_decode(words, hidden, packed, hidden_size, split=False):
    """Run T decoder steps in one pallas_call (weights resident across steps).

    words : anything reshapable to (T, 1, H)  (PyTorch (seq, batch, H) layout).
    hidden: (1, 1, H) initial hidden state.
    Returns hidden_seq (T,1,H) if not split, else (hidden_seq, cluster1_seq, cluster2_seq).
    """
    H = hidden_size
    Hp = packed["w_gx"].shape[0]
    T = words.size // H
    w = jnp.asarray(words, jnp.float32).reshape(T, H)
    h0 = jnp.asarray(hidden, jnp.float32).reshape(1, H)
    if Hp != H:
        # NOTE: padded hidden lanes stay zero because padded weights/biases and the
        # padded h0 lanes are zero; callers must not pass non-zero padded state.
        w = jnp.pad(w, ((0, 0), (0, Hp - H)))
        h0 = jnp.pad(h0, ((0, 0), (0, Hp - H)))
    w = w.astype(jnp.bfloat16)               # bf16 matmul operand -> halve input DMA
    out = _decoder_pallas(w, h0, packed, split)
    hid = out[:, :H].reshape(T, 1, H)
    if not split:
        return hid
    c1 = out[:, Hp:Hp + H].reshape(T, 1, H)
    c2 = out[:, 2 * Hp:2 * Hp + H].reshape(T, 1, H)
    return hid, c1, c2


def decoder_forward(word, hidden, packed, hidden_size, split=False):
    """Mirrors DecoderRNN.forward exactly (single step, batch 1)."""
    if not split:
        h_seq = decoder_decode(word, hidden, packed, hidden_size, split=False)
        return h_seq.reshape(1, 1, hidden_size)                 # new hidden
    _, c1_seq, c2_seq = decoder_decode(word, hidden, packed, hidden_size, split=True)
    return (c1_seq.reshape(1, 1, hidden_size), c2_seq.reshape(1, 1, hidden_size))


# ---------------------------------------------------------------------------
# Pure-JAX reference (same bf16 rounding of matmul operands as the kernel)
# ---------------------------------------------------------------------------
def _reference_decode(words, hidden, raw, H):
    bf = lambda a: a.astype(jnp.bfloat16)
    dot = lambda a, b: jnp.dot(bf(a), bf(b), preferred_element_type=jnp.float32)
    T = words.size // H
    xs = jnp.asarray(words, jnp.float32).reshape(T, H)
    h = jnp.asarray(hidden, jnp.float32).reshape(1, H)
    hs, c1s, c2s = [], [], []
    for t in range(T):
        x = xs[t:t + 1]
        gi = dot(x, raw["w_ih"]) + raw["b_ih"]
        gh = dot(h, raw["w_hh"]) + raw["b_hh"]
        r = jax.nn.sigmoid(gi[:, :H] + gh[:, :H])
        z = jax.nn.sigmoid(gi[:, H:2 * H] + gh[:, H:2 * H])
        n = jnp.tanh(gi[:, 2 * H:] + r * gh[:, 2 * H:])
        h = (1.0 - z) * n + z * h
        ext = jnp.maximum(dot(h, raw["w3"]) + raw["b3"], 0.0)
        c1s.append(jnp.maximum(dot(ext[:, :H], raw["w1"]) + raw["b1"], 0.0))
        c2s.append(jnp.maximum(dot(ext[:, H:], raw["w2"]) + raw["b2"], 0.0))
        hs.append(h)
    return jnp.stack(hs), jnp.stack(c1s), jnp.stack(c2s)        # each (T, 1, H)


if __name__ == "__main__":
    H, T = 128, 12                      # small, lane-aligned stand-in for hidden_size=300
    key = jax.random.PRNGKey(0)
    kp, kw, kp2, kw2 = jax.random.split(key, 4)

    raw = init_params(kp, H)
    packed = pack_params(raw, H)
    words = jax.random.normal(kw, (T, 1, H), jnp.float32)
    h0 = jnp.zeros((1, 1, H), jnp.float32)               # initHidden()

    h_ref, c1_ref, c2_ref = _reference_decode(words, h0, raw, H)

    # --- single-step forward, exactly DecoderRNN.forward semantics ---
    h1 = decoder_forward(words[0], h0, packed, H, split=False)       # new hidden
    c1, c2 = decoder_forward(words[0], h0, packed, H, split=True)    # clusters
    jax.block_until_ready((h1, c1, c2))
    assert jnp.allclose(h1[0], h_ref[0], atol=2e-3, rtol=2e-3)
    assert jnp.allclose(c1[0], c1_ref[0], atol=2e-3, rtol=2e-3)
    assert jnp.allclose(c2[0], c2_ref[0], atol=2e-3, rtol=2e-3)

    # --- full T-step decode with weights resident in VMEM (T < Tc: full-array block) ---
    h_seq, c1_seq, c2_seq = decoder_decode(words, h0, packed, H, split=True)
    jax.block_until_ready((h_seq, c1_seq, c2_seq))
    assert jnp.allclose(h_seq, h_ref, atol=2e-3, rtol=2e-3)
    assert jnp.allclose(c1_seq, c1_ref, atol=2e-3, rtol=2e-3)
    assert jnp.allclose(c2_seq, c2_ref, atol=2e-3, rtol=2e-3)

    # --- long decode: exercises the chunked (Tc=16) grid with T padding ---
    T3 = 37
    words3 = jax.random.normal(jax.random.PRNGKey(7), (T3, 1, H), jnp.float32)
    h_seq3, c1_seq3, c2_seq3 = decoder_decode(words3, h0, packed, H, split=True)
    hr3, c1r3, c2r3 = _reference_decode(words3, h0, raw, H)
    jax.block_until_ready((h_seq3, c1_seq3, c2_seq3))
    assert jnp.allclose(h_seq3, hr3, atol=5e-3, rtol=5e-3)
    assert jnp.allclose(c1_seq3, c1r3, atol=5e-3, rtol=5e-3)
    assert jnp.allclose(c2_seq3, c2r3, atol=5e-3, rtol=5e-3)

    # --- non-multiple-of-128 hidden size exercises the lane-padding path (300 -> 384) ---
    H2, T2 = 96, 5
    raw2 = init_params(kp2, H2)
    packed2 = pack_params(raw2, H2)
    words2 = jax.random.normal(kw2, (T2, 1, H2), jnp.float32)
    h02 = jnp.zeros((1, 1, H2), jnp.float32)
    h_seq2, c1_seq2, c2_seq2 = decoder_decode(words2, h02, packed2, H2, split=True)
    hr2, c1r2, c2r2 = _reference_decode(words2, h02, raw2, H2)
    jax.block_until_ready((h_seq2, c1_seq2, c2_seq2))
    assert jnp.allclose(h_seq2, hr2, atol=2e-3, rtol=2e-3)
    assert jnp.allclose(c1_seq2, c1r2, atol=2e-3, rtol=2e-3)
    assert jnp.allclose(c2_seq2, c2r2, atol=2e-3, rtol=2e-3)

    print("KERNEL_OK")
</pallas_src>

<mosaic_0001>
module attributes {stable_mosaic.version = 11 : i64} {
  func.func @_hidden_kernel(%arg0: i32, %arg1: memref<1x128xbf16, #tpu.memory_space<vmem>>, %arg2: memref<1x128xf32, #tpu.memory_space<vmem>>, %arg3: memref<128x384xbf16, #tpu.memory_space<vmem>>, %arg4: memref<128x384xbf16, #tpu.memory_space<vmem>>, %arg5: memref<1x384xf32, #tpu.memory_space<vmem>>, %arg6: memref<1x384xf32, #tpu.memory_space<vmem>>, %arg7: memref<1x128xf32, #tpu.memory_space<vmem>>, %arg8: memref<1x128xf32, #tpu.memory_space<vmem>>) attributes {dimension_semantics = [#tpu.dimension_semantics<arbitrary>], iteration_bounds = array<i64: 1>, scalar_prefetch = 0 : i64, scratch_operands = 1 : i64, tpu.core_type = #tpu.core_type<tc>, window_params = [{transform_indices = @transform_0, window_bounds = array<i64: 1, 128>}, {pipeline_mode = #tpu.pipeline_mode<synchronous>, transform_indices = @transform_1, window_bounds = array<i64: 1, 128>}, {pipeline_mode = #tpu.pipeline_mode<synchronous>, transform_indices = @transform_2, window_bounds = array<i64: 128, 384>}, {pipeline_mode = #tpu.pipeline_mode<synchronous>, transform_indices = @transform_3, window_bounds = array<i64: 128, 384>}, {pipeline_mode = #tpu.pipeline_mode<synchronous>, transform_indices = @transform_4, window_bounds = array<i64: 1, 384>}, {pipeline_mode = #tpu.pipeline_mode<synchronous>, transform_indices = @transform_5, window_bounds = array<i64: 1, 384>}, {transform_indices = @transform_6, window_bounds = array<i64: 1, 128>}]} {
    %c0_i32 = arith.constant 0 : i32
    %0 = arith.cmpi eq, %arg0, %c0_i32 : i32
    %1 = arith.extui %0 : i1 to i32
    %c0_i32_0 = arith.constant 0 : i32
    %2 = arith.cmpi ne, %1, %c0_i32_0 : i32
    scf.if %2 {
      %c0_20 = arith.constant 0 : index
      %c0_21 = arith.constant 0 : index
      %42 = vector.load %arg2[%c0_20, %c0_21] : memref<1x128xf32, #tpu.memory_space<vmem>>, vector<1x128xf32>
      %c0_22 = arith.constant 0 : index
      %c0_23 = arith.constant 0 : index
      %43 = vector.load %arg8[%c0_22, %c0_23] : memref<1x128xf32, #tpu.memory_space<vmem>>, vector<1x128xf32>
      tpu.vector_store %arg8[%c0_22, %c0_23], %42 {strides = array<i32>} : memref<1x128xf32, #tpu.memory_space<vmem>>, vector<1x128xf32>,
    } else {
    }
    %c0 = arith.constant 0 : index
    %c0_1 = arith.constant 0 : index
    %3 = vector.load %arg8[%c0, %c0_1] : memref<1x128xf32, #tpu.memory_space<vmem>>, vector<1x128xf32>
    %c0_2 = arith.constant 0 : index
    %c0_3 = arith.constant 0 : index
    %4 = vector.load %arg1[%c0_2, %c0_3] : memref<1x128xbf16, #tpu.memory_space<vmem>>, vector<1x128xbf16>
    %c0_4 = arith.constant 0 : index
    %c0_5 = arith.constant 0 : index
    %5 = vector.load %arg3[%c0_4, %c0_5] : memref<128x384xbf16, #tpu.memory_space<vmem>>, vector<128x384xbf16>
    %cst = arith.constant dense<0.000000e+00> : vector<1x384xf32>
    %6 = tpu.matmul %4, %5, %cst {dimension_numbers = #tpu.dot_dimension_numbers<[1], [0], [0], [1], [0, 0, 1, 1], [], []>} : vector<1x128xbf16>, vector<128x384xbf16>, vector<1x384xf32> -> vector<1x384xf32>
    %c0_6 = arith.constant 0 : index
    %c0_7 = arith.constant 0 : index
    %7 = vector.load %arg5[%c0_6, %c0_7] : memref<1x384xf32, #tpu.memory_space<vmem>>, vector<1x384xf32>
    %8 = arith.addf %6, %7 : vector<1x384xf32>
    %9 = arith.truncf %3 : vector<1x128xf32> to vector<1x128xbf16>
    %c0_8 = arith.constant 0 : index
    %c0_9 = arith.constant 0 : index
    %10 = vector.load %arg4[%c0_8, %c0_9] : memref<128x384xbf16, #tpu.memory_space<vmem>>, vector<128x384xbf16>
    %cst_10 = arith.constant dense<0.000000e+00> : vector<1x384xf32>
    %11 = tpu.matmul %9, %10, %cst_10 {dimension_numbers = #tpu.dot_dimension_numbers<[1], [0], [0], [1], [0, 0, 1, 1], [], []>} : vector<1x128xbf16>, vector<128x384xbf16>, vector<1x384xf32> -> vector<1x384xf32>
    %c0_11 = arith.constant 0 : index
    %c0_12 = arith.constant 0 : index
    %12 = vector.load %arg6[%c0_11, %c0_12] : memref<1x384xf32, #tpu.memory_space<vmem>>, vector<1x384xf32>
    %13 = arith.addf %11, %12 : vector<1x384xf32>
    %14 = vector.extract_strided_slice %8 {offsets = [0, 0], sizes = [1, 128], strides = [1, 1]} : vector<1x384xf32> to vector<1x128xf32>
    %15 = vector.extract_strided_slice %13 {offsets = [0, 0], sizes = [1, 128], strides = [1, 1]} : vector<1x384xf32> to vector<1x128xf32>
    %16 = arith.addf %14, %15 : vector<1x128xf32>
    %17 = arith.negf %16 : vector<1x128xf32>
    %18 = math.exp %17 : vector<1x128xf32>
    %cst_13 = arith.constant 1.000000e+00 : f32
    %19 = vector.broadcast %cst_13 : f32 to vector<1x128xf32>
    %20 = arith.addf %19, %18 : vector<1x128xf32>
    %21 = arith.divf %19, %20 : vector<1x128xf32>
    %22 = vector.extract_strided_slice %8 {offsets = [0, 128], sizes = [1, 128], strides = [1, 1]} : vector<1x384xf32> to vector<1x128xf32>
    %23 = vector.extract_strided_slice %13 {offsets = [0, 128], sizes = [1, 128], strides = [1, 1]} : vector<1x384xf32> to vector<1x128xf32>
    %24 = arith.addf %22, %23 : vector<1x128xf32>
    %25 = arith.negf %24 : vector<1x128xf32>
    %26 = math.exp %25 : vector<1x128xf32>
    %cst_14 = arith.constant 1.000000e+00 : f32
    %27 = vector.broadcast %cst_14 : f32 to vector<1x128xf32>
    %28 = arith.addf %27, %26 : vector<1x128xf32>
    %29 = arith.divf %27, %28 : vector<1x128xf32>
    %30 = vector.extract_strided_slice %8 {offsets = [0, 256], sizes = [1, 128], strides = [1, 1]} : vector<1x384xf32> to vector<1x128xf32>
    %31 = vector.extract_strided_slice %13 {offsets = [0, 256], sizes = [1, 128], strides = [1, 1]} : vector<1x384xf32> to vector<1x128xf32>
    %32 = arith.mulf %21, %31 : vector<1x128xf32>
    %33 = arith.addf %30, %32 : vector<1x128xf32>
    %34 = math.tanh %33 : vector<1x128xf32>
    %cst_15 = arith.constant 1.000000e+00 : f32
    %35 = vector.broadcast %cst_15 : f32 to vector<1x128xf32>
    %36 = arith.subf %35, %29 : vector<1x128xf32>
    %37 = arith.mulf %36, %34 : vector<1x128xf32>
    %38 = arith.mulf %29, %3 : vector<1x128xf32>
    %39 = arith.addf %37, %38 : vector<1x128xf32>
    %c0_16 = arith.constant 0 : index
    %c0_17 = arith.constant 0 : index
    %40 = vector.load %arg7[%c0_16, %c0_17] : memref<1x128xf32, #tpu.memory_space<vmem>>, vector<1x128xf32>
    tpu.vector_store %arg7[%c0_16, %c0_17], %39 {strides = array<i32>} : memref<1x128xf32, #tpu.memory_space<vmem>>, vector<1x128xf32>,
    %c0_18 = arith.constant 0 : index
    %c0_19 = arith.constant 0 : index
    %41 = vector.load %arg8[%c0_18, %c0_19] : memref<1x128xf32, #tpu.memory_space<vmem>>, vector<1x128xf32>
    tpu.vector_store %arg8[%c0_18, %c0_19], %39 {strides = array<i32>} : memref<1x128xf32, #tpu.memory_space<vmem>>, vector<1x128xf32>,
    return
  }
  func.func @transform_0(%arg0: i32) -> (i32, i32) {
    %c0_i32 = arith.constant 0 : i32
    %c0_i32_0 = arith.constant 0 : i32
    return %arg0, %c0_i32 : i32, i32
  }
  func.func @transform_1(%arg0: i32) -> (i32, i32) {
    %c0_i32 = arith.constant 0 : i32
    %c0_i32_0 = arith.constant 0 : i32
    %c0_i32_1 = arith.constant 0 : i32
    return %c0_i32, %c0_i32_0 : i32, i32
  }
  func.func @transform_2(%arg0: i32) -> (i32, i32) {
    %c0_i32 = arith.constant 0 : i32
    %c0_i32_0 = arith.constant 0 : i32
    %c0_i32_1 = arith.constant 0 : i32
    return %c0_i32, %c0_i32_0 : i32, i32
  }
  func.func @transform_3(%arg0: i32) -> (i32, i32) {
    %c0_i32 = arith.constant 0 : i32
    %c0_i32_0 = arith.constant 0 : i32
    %c0_i32_1 = arith.constant 0 : i32
    return %c0_i32, %c0_i32_0 : i32, i32
  }
  func.func @transform_4(%arg0: i32) -> (i32, i32) {
    %c0_i32 = arith.constant 0 : i32
    %c0_i32_0 = arith.constant 0 : i32
    %c0_i32_1 = arith.constant 0 : i32
    return %c0_i32, %c0_i32_0 : i32, i32
  }
  func.func @transform_5(%arg0: i32) -> (i32, i32) {
    %c0_i32 = arith.constant 0 : i32
    %c0_i32_0 = arith.constant 0 : i32
    %c0_i32_1 = arith.constant 0 : i32
    return %c0_i32, %c0_i32_0 : i32, i32
  }
  func.func @transform_6(%arg0: i32) -> (i32, i32) {
    %c0_i32 = arith.constant 0 : i32
    %c0_i32_0 = arith.constant 0 : i32
    return %arg0, %c0_i32 : i32, i32
  }
}

</mosaic_0001>

<llo_original>
// kernel: _decoder_pallas.1
$region0: #{_decoder_pallas.1}
  #allocation0 [shape = 'u32[]', space=smem, size = 0x4, offset = 0x4, fixed_abs, tag = 'smem constant byte address 0x4 - core index']
  #allocation1 [shape = 'u32[144,128]{1,0:T(1,128)}', space=vmem, size = 0x12000, scoped, tag = 'internal scratch']
  #allocation2 [shape = 'f32[1,128]{1,0:T(1,128)}', space=vmem, size = 0x200, scoped, tag = 'scratch operand']
  %s0 = inlined_call_operand.hbm [shape: bf16[1,128], index: 0, kind: input, shape index: {}]
  %s1 = inlined_call_operand.vmem [shape: f32[1,128], index: 1, kind: input, shape index: {}]
  %s2 = inlined_call_operand.hbm [shape: bf16[128,384], index: 2, kind: input, shape index: {}]
  %s3 = inlined_call_operand.hbm [shape: bf16[128,384], index: 3, kind: input, shape index: {}]
  %s4 = inlined_call_operand.vmem [shape: f32[1,384], index: 4, kind: input, shape index: {}]
  %s5 = inlined_call_operand.vmem [shape: f32[1,384], index: 5, kind: input, shape index: {}]
  %s6 = inlined_call_operand.hbm [shape: f32[1,128], index: 6, kind: output, shape index: {}]
  %s7 = sld [smem:[#allocation0]]
  $region50: #{_decoder_pallas.1} parent=0
    _
  %s9 = ssub.s32 1, %s7
  %s10 = scalar_select 0, %s9, %s7
  $region1: #{_decoder_pallas.1} parent=0
    #allocation3 [shape = 'u8[512]{0}', space=vmem, size = 0x400, scoped, tag = 'input window, operand 0, single buffered']
    #allocation4 [shape = 's32[1]{0}', space=sflag, size = 0x4, scoped, tag = 'scoped memory for _decoder_pallas.1']
    #allocation5 [shape = 's32[1]{0}', space=sflag, size = 0x4, scoped, tag = 'scoped memory for _decoder_pallas.1']
    #allocation6 [shape = 'u8[98304]{0}', space=vmem, size = 0x18000, scoped, tag = 'input window, operand 2, single buffered']
    #allocation7 [shape = 's32[1]{0}', space=sflag, size = 0x4, scoped, tag = 'scoped memory for _decoder_pallas.1']
    #allocation8 [shape = 'u8[98304]{0}', space=vmem, size = 0x18000, scoped, tag = 'input window, operand 3, single buffered']
    #allocation9 [shape = 'u8[512]{0}', space=vmem, size = 0x400, scoped, tag = 'output window, operand 0, single buffered']
    %11 = vsyncpa [#allocation4], 0
    %12 = vsyncpa [#allocation7], 0
    %13 = vsyncpa [#allocation5], 0
    // Predicated region
    $region2: #{_decoder_pallas.1} parent=1 // pred_check
      _
    $region3: #{_decoder_pallas.1} parent=1 // pred_check_branch
      %15 = sbr.rel (0) target = $region5
    $region4: #{_decoder_pallas.1} parent=1 // pred_region
      %s17 = ssub.s32 16, 16
      %18 = vsyncadd [#allocation4], %s17
      %s20 = sshll.u32 [#allocation3], 4
      %s21 = int_to_ptr.vmem [resolvable:$true] %s20
      %23 = dma.hbm_to_vmem [thread:$0]  %s0, 16, %s21, [#allocation4]
    $region5: #{_decoder_pallas.1} parent=1 // pred_fallthru
      _
    // Predicated region
    $region6: #{_decoder_pallas.1} parent=1 // pred_check
      _
    $region7: #{_decoder_pallas.1} parent=1 // pred_check_branch
      %25 = sbr.rel (0) target = $region9
    $region8: #{_decoder_pallas.1} parent=1 // pred_region
      _
    $region9: #{_decoder_pallas.1} parent=1 // pred_fallthru
      _
    // Predicated region
    $region10: #{_decoder_pallas.1} parent=1 // pred_check
      _
    $region11: #{_decoder_pallas.1} parent=1 // pred_check_branch
      %27 = sbr.rel (0) target = $region13
    $region12: #{_decoder_pallas.1} parent=1 // pred_region
      %s29 = ssub.s32 3072, 3072
      %30 = vsyncadd [#allocation7], %s29
      %s31 = sshll.u32 [#allocation6], 4
      %s32 = int_to_ptr.vmem [resolvable:$true] %s31
      %37 = dma.hbm_to_vmem [thread:$0]  %s2, 3072, %s32, [#allocation7], 192, 192, 12
    $region13: #{_decoder_pallas.1} parent=1 // pred_fallthru
      _
    // Predicated region
    $region14: #{_decoder_pallas.1} parent=1 // pred_check
      _
    $region15: #{_decoder_pallas.1} parent=1 // pred_check_branch
      %39 = sbr.rel (0) target = $region17
    $region16: #{_decoder_pallas.1} parent=1 // pred_region
      %s41 = ssub.s32 3072, 3072
      %42 = vsyncadd [#allocation7], %s41
      %s43 = sshll.u32 [#allocation8], 4
      %s44 = int_to_ptr.vmem [resolvable:$true] %s43
      %49 = dma.hbm_to_vmem [thread:$0]  %s3, 3072, %s44, [#allocation7], 192, 192, 12
    $region17: #{_decoder_pallas.1} parent=1 // pred_fallthru
      _
    // Predicated region
    $region18: #{_decoder_pallas.1} parent=1 // pred_check
      _
    $region19: #{_decoder_pallas.1} parent=1 // pred_check_branch
      %51 = sbr.rel (0) target = $region21
    $region20: #{_decoder_pallas.1} parent=1 // pred_region
      _
    $region21: #{_decoder_pallas.1} parent=1 // pred_fallthru
      _
    // Predicated region
    $region22: #{_decoder_pallas.1} parent=1 // pred_check
      _
    $region23: #{_decoder_pallas.1} parent=1 // pred_check_branch
      %53 = sbr.rel (0) target = $region25
    $region24: #{_decoder_pallas.1} parent=1 // pred_region
      _
    $region25: #{_decoder_pallas.1} parent=1 // pred_fallthru
      _
    // Predicated region
    $region26: #{_decoder_pallas.1} parent=1 // pred_check
      _
    $region27: #{_decoder_pallas.1} parent=1 // pred_check_branch
      %55 = sbr.rel (0) target = $region29
    $region28: #{_decoder_pallas.1} parent=1 // pred_region
      %56 = dma.done [#allocation4], 16
    $region29: #{_decoder_pallas.1} parent=1 // pred_fallthru
      _
    // Predicated region
    $region30: #{_decoder_pallas.1} parent=1 // pred_check
      _
    $region31: #{_decoder_pallas.1} parent=1 // pred_check_branch
      %58 = sbr.rel (0) target = $region33
    $region32: #{_decoder_pallas.1} parent=1 // pred_region
      %59 = dma.done [#allocation7], 3072
    $region33: #{_decoder_pallas.1} parent=1 // pred_fallthru
      _
    // Predicated region
    $region34: #{_decoder_pallas.1} parent=1 // pred_check
      _
    $region35: #{_decoder_pallas.1} parent=1 // pred_check_branch
      %61 = sbr.rel (0) target = $region37
    $region36: #{_decoder_pallas.1} parent=1 // pred_region
      %62 = dma.done [#allocation7], 3072
    $region37: #{_decoder_pallas.1} parent=1 // pred_fallthru
      _
    %p64 = scmp.eq.s32.totalorder 0, 0
    // Predicated region
    $region38: #{_decoder_pallas.1} parent=1 // pred_check
      %p65 = pneg %p64
    $region39: #{_decoder_pallas.1} parent=1 // pred_check_branch
      %67 = sbr.rel (%p65) target = $region41
    $region40: #{_decoder_pallas.1} parent=1 // pred_region
      %v68 = vld [vmem:[%s1] sm:$0x1]
      %69 = vst [vmem:[#allocation2] sm:$0x1] %v68
    $region41: #{_decoder_pallas.1} parent=1 // pred_fallthru
      _
    %v70 = vld [vmem:[#allocation2] sm:$0x1]
    %v71 = vld [vmem:[#allocation3] sm:$0x1]
    %v72 = vld [vmem:[#allocation6] sm:$0xff]
    %v73 = vld [vmem:[#allocation6 + $0x8] sm:$0xf]
    %v74 = vld [vmem:[#allocation6 + $0xc] sm:$0xff]
    %v75 = vld [vmem:[#allocation6 + $0x14] sm:$0xf]
    %v76 = vld [vmem:[#allocation6 + $0x18] sm:$0xff]
    %v77 = vld [vmem:[#allocation6 + $0x20] sm:$0xf]
    %v78 = vld [vmem:[#allocation6 + $0x24] sm:$0xff]
    %v79 = vld [vmem:[#allocation6 + $0x2c] sm:$0xf]
    %v80 = vld [vmem:[#allocation6 + $0x30] sm:$0xff]
    %v81 = vld [vmem:[#allocation6 + $0x38] sm:$0xf]
    %v82 = vld [vmem:[#allocation6 + $0x3c] sm:$0xff]
    %v83 = vld [vmem:[#allocation6 + $0x44] sm:$0xf]
    %v84 = vld [vmem:[#allocation6 + $0x48] sm:$0xff]
    %v85 = vld [vmem:[#allocation6 + $0x50] sm:$0xf]
    %v86 = vld [vmem:[#allocation6 + $0x54] sm:$0xff]
    %v87 = vld [vmem:[#allocation6 + $0x5c] sm:$0xf]
    %v88 = vld [vmem:[#allocation6 + $0x60] sm:$0xff]
    %v89 = vld [vmem:[#allocation6 + $0x68] sm:$0xf]
    %v90 = vld [vmem:[#allocation6 + $0x6c] sm:$0xff]
    %v91 = vld [vmem:[#allocation6 + $0x74] sm:$0xf]
    %v92 = vld [vmem:[#allocation6 + $0x78] sm:$0xff]
    %v93 = vld [vmem:[#allocation6 + $0x80] sm:$0xf]
    %v94 = vld [vmem:[#allocation6 + $0x84] sm:$0xff]
    %v95 = vld [vmem:[#allocation6 + $0x8c] sm:$0xf]
    %v96 = vld [vmem:[#allocation6 + $0x90] sm:$0xff]
    %v97 = vld [vmem:[#allocation6 + $0x98] sm:$0xf]
    %v98 = vld [vmem:[#allocation6 + $0x9c] sm:$0xff]
    %v99 = vld [vmem:[#allocation6 + $0xa4] sm:$0xf]
    %v100 = vld [vmem:[#allocation6 + $0xa8] sm:$0xff]
    %v101 = vld [vmem:[#allocation6 + $0xb0] sm:$0xf]
    %v102 = vld [vmem:[#allocation6 + $0xb4] sm:$0xff]
    %v103 = vld [vmem:[#allocation6 + $0xbc] sm:$0xf]
    %v104 = vld [vmem:[%s4] sm:$0x7]
    %v137 = vunpack.c.l.b16 %v72
    %v138 = vunpack.c.h.b16 %v72
    %v139 = vunpack.c.l.b16 %v73
    %v140 = vunpack.c.l.b16 %v74
    %v141 = vunpack.c.h.b16 %v74
    %v142 = vunpack.c.l.b16 %v75
    %v143 = vunpack.c.l.b16 %v76
    %v144 = vunpack.c.h.b16 %v76
    %v145 = vunpack.c.l.b16 %v77
    %v146 = vunpack.c.l.b16 %v78
    %v147 = vunpack.c.h.b16 %v78
    %v148 = vunpack.c.l.b16 %v79
    %v149 = vunpack.c.l.b16 %v80
    %v150 = vunpack.c.h.b16 %v80
    %v151 = vunpack.c.l.b16 %v81
    %v152 = vunpack.c.l.b16 %v82
    %v153 = vunpack.c.h.b16 %v82
    %v154 = vunpack.c.l.b16 %v83
    %v155 = vunpack.c.l.b16 %v84
    %v156 = vunpack.c.h.b16 %v84
    %v157 = vunpack.c.l.b16 %v85
    %v158 = vunpack.c.l.b16 %v86
    %v159 = vunpack.c.h.b16 %v86
    %v160 = vunpack.c.l.b16 %v87
    %v161 = vunpack.c.l.b16 %v88
    %v162 = vunpack.c.h.b16 %v88
    %v163 = vunpack.c.l.b16 %v89
    %v164 = vunpack.c.l.b16 %v90
    %v165 = vunpack.c.h.b16 %v90
    %v166 = vunpack.c.l.b16 %v91
    %v167 = vunpack.c.l.b16 %v92
    %v168 = vunpack.c.h.b16 %v92
    %v169 = vunpack.c.l.b16 %v93
    %v170 = vunpack.c.l.b16 %v94
    %v171 = vunpack.c.h.b16 %v94
    %v172 = vunpack.c.l.b16 %v95
    %v173 = vunpack.c.l.b16 %v96
    %v174 = vunpack.c.h.b16 %v96
    %v175 = vunpack.c.l.b16 %v97
    %v176 = vunpack.c.l.b16 %v98
    %v177 = vunpack.c.h.b16 %v98
    %v178 = vunpack.c.l.b16 %v99
    %v179 = vunpack.c.l.b16 %v100
    %v180 = vunpack.c.h.b16 %v100
    %v181 = vunpack.c.l.b16 %v101
    %v182 = vunpack.c.l.b16 %v102
    %v183 = vunpack.c.h.b16 %v102
    %v184 = vunpack.c.l.b16 %v103
    %v185 = vpack.c.b16 %v140, %v137
    %v186 = vpack.c.b16 %v141, %v138
    %v187 = vpack.c.b16 %v142, %v139
    %v188 = vpack.c.b16 %v146, %v143
    %v189 = vpack.c.b16 %v147, %v144
    %v190 = vpack.c.b16 %v148, %v145
    %v191 = vpack.c.b16 %v152, %v149
    %v192 = vpack.c.b16 %v153, %v150
    %v193 = vpack.c.b16 %v154, %v151
    %v194 = vpack.c.b16 %v158, %v155
    %v195 = vpack.c.b16 %v159, %v156
    %v196 = vpack.c.b16 %v160, %v157
    %v197 = vpack.c.b16 %v164, %v161
    %v198 = vpack.c.b16 %v165, %v162
    %v199 = vpack.c.b16 %v166, %v163
    %v200 = vpack.c.b16 %v170, %v167
    %v201 = vpack.c.b16 %v171, %v168
    %v202 = vpack.c.b16 %v172, %v169
    %v203 = vpack.c.b16 %v176, %v173
    %v204 = vpack.c.b16 %v177, %v174
    %v205 = vpack.c.b16 %v178, %v175
    %v206 = vpack.c.b16 %v182, %v179
    %v207 = vpack.c.b16 %v183, %v180
    %v208 = vpack.c.b16 %v184, %v181
    %v234 = vlaneseq
    %v235 = vshrl.u32 %v234, 7
    %v236 = vsub.s32 0, %v235
    %v237 = vrot.slane %v104, %v236
    %v238 = vlaneseq
    %v239 = vshrl.u32 %v238, 7
    %v240 = vsub.s32 1, %v239
    %v241 = vrot.slane %v104, %v240
    %v242 = vlaneseq
    %v243 = vshrl.u32 %v242, 7
    %v244 = vsub.s32 2, %v243
    %v245 = vrot.slane %v104, %v244
    %249 = vmatprep.subr.bf16.mxu0 %v186
    %250 = vmatpush1.bf16.msra.mxu0 %v185
    %251 = vmatprep.subr.bf16.mxu0 %v189
    %252 = vmatpush1.bf16.msra.mxu0 %v188
    %253 = vmatprep.subr.bf16.mxu0 %v192
    %254 = vmatpush1.bf16.msra.mxu0 %v191
    %255 = vmatprep.subr.bf16.mxu0 %v195
    %256 = vmatpush1.bf16.msra.mxu0 %v194
    %257 = vmatprep.subr.bf16.mxu0 %v198
    %258 = vmatpush1.bf16.msra.mxu0 %v197
    %259 = vmatprep.subr.bf16.mxu0 %v201
    %260 = vmatpush1.bf16.msra.mxu0 %v200
    %261 = vmatprep.subr.bf16.mxu0 %v204
    %262 = vmatpush1.bf16.msra.mxu0 %v203
    %263 = vmatprep.subr.bf16.mxu0 %v207
    %264 = vmatpush1.bf16.msra.mxu0 %v206
    %265 = vmatprep.subr.bf16.mxu0 0
    %266 = vmatpush1.bf16.msra.mxu0 0
    %267 = vmatprep.subr.bf16.mxu0 0
    %268 = vmatpush1.bf16.msra.mxu0 0
    %269 = vmatprep.subr.bf16.mxu0 0
    %270 = vmatpush1.bf16.msra.mxu0 0
    %271 = vmatprep.subr.bf16.mxu0 0
    %272 = vmatpush1.bf16.msra.mxu0 0
    %273 = vmatprep.subr.bf16.mxu0 0
    %274 = vmatpush1.bf16.msra.mxu0 0
    %275 = vmatprep.subr.bf16.mxu0 0
    %276 = vmatpush1.bf16.msra.mxu0 0
    %277 = vmatprep.subr.bf16.mxu0 0
    %278 = vmatpush1.bf16.msra.mxu0 0
    %279 = vmatprep.subr.bf16.mxu0 0
    %280 = vmatpush1.bf16.msra.mxu0 0
    %281 = vmatprep.mubr.bf16.mxu0 0
    %282 = vmatmul.mubr.bf16.gmra.mrb[0].mxu0 %v71
    %v283 = vpop.f32.mrb[0].mxu0
    %v284 = vadd.f32 %v237, %v283
    %v285 = vpop.f32.mrb[0].mxu0
    %v286 = vadd.f32 %v241, %v285
    %v287 = vpop.f32.mrb[0].mxu0
    %v288 = vpop.f32.mrb[0].mxu0
    %289 = vdwg.mxu0
    %290 = vmatprep.subr.bf16.mxu0 0
    %291 = vmatpush1.bf16.msra.mxu0 %v187
    %292 = vmatprep.subr.bf16.mxu0 0
    %293 = vmatpush1.bf16.msra.mxu0 %v190
    %294 = vmatprep.subr.bf16.mxu0 0
    %295 = vmatpush1.bf16.msra.mxu0 %v193
    %296 = vmatprep.subr.bf16.mxu0 0
    %297 = vmatpush1.bf16.msra.mxu0 %v196
    %298 = vmatprep.subr.bf16.mxu0 0
    %299 = vmatpush1.bf16.msra.mxu0 %v199
    %300 = vmatprep.subr.bf16.mxu0 0
    %301 = vmatpush1.bf16.msra.mxu0 %v202
    %302 = vmatprep.subr.bf16.mxu0 0
    %303 = vmatpush1.bf16.msra.mxu0 %v205
    %304 = vmatprep.subr.bf16.mxu0 0
    %305 = vmatpush1.bf16.msra.mxu0 %v208
    %306 = vmatprep.subr.bf16.mxu0 0
    %307 = vmatpush1.bf16.msra.mxu0 0
    %308 = vmatprep.subr.bf16.mxu0 0
    %309 = vmatpush1.bf16.msra.mxu0 0
    %310 = vmatprep.subr.bf16.mxu0 0
    %311 = vmatpush1.bf16.msra.mxu0 0
    %312 = vmatprep.subr.bf16.mxu0 0
    %313 = vmatpush1.bf16.msra.mxu0 0
    %314 = vmatprep.subr.bf16.mxu0 0
    %315 = vmatpush1.bf16.msra.mxu0 0
    %316 = vmatprep.subr.bf16.mxu0 0
    %317 = vmatpush1.bf16.msra.mxu0 0
    %318 = vmatprep.subr.bf16.mxu0 0
    %319 = vmatpush1.bf16.msra.mxu0 0
    %320 = vmatprep.subr.bf16.mxu0 0
    %321 = vmatpush1.bf16.msra.mxu0 0
    %322 = vmatprep.mubr.bf16.mxu0 0
    %323 = vmatmul.mubr.bf16.gmra.mrb[0].mxu0 %v71
    %v324 = vpop.f32.mrb[0].mxu0
    %v325 = vadd.f32 %v245, %v324
    %v326 = vpop.f32.mrb[0].mxu0
    %v327 = vpop.f32.mrb[0].mxu0
    %v328 = vpop.f32.mrb[0].mxu0
    %329 = vdwg.mxu0
    %v330 = vpack.c.bf16 %v70, %v70
    %v331 = vld [vmem:[#allocation8] sm:$0xff]
    %v332 = vld [vmem:[#allocation8 + $0x8] sm:$0xf]
    %v333 = vld [vmem:[#allocation8 + $0xc] sm:$0xff]
    %v334 = vld [vmem:[#allocation8 + $0x14] sm:$0xf]
    %v335 = vld [vmem:[#allocation8 + $0x18] sm:$0xff]
    %v336 = vld [vmem:[#allocation8 + $0x20] sm:$0xf]
    %v337 = vld [vmem:[#allocation8 + $0x24] sm:$0xff]
    %v338 = vld [vmem:[#allocation8 + $0x2c] sm:$0xf]
    %v339 = vld [vmem:[#allocation8 + $0x30] sm:$0xff]
    %v340 = vld [vmem:[#allocation8 + $0x38] sm:$0xf]
    %v341 = vld [vmem:[#allocation8 + $0x3c] sm:$0xff]
    %v342 = vld [vmem:[#allocation8 + $0x44] sm:$0xf]
    %v343 = vld [vmem:[#allocation8 + $0x48] sm:$0xff]
    %v344 = vld [vmem:[#allocation8 + $0x50] sm:$0xf]
    %v345 = vld [vmem:[#allocation8 + $0x54] sm:$0xff]
    %v346 = vld [vmem:[#allocation8 + $0x5c] sm:$0xf]
    %v347 = vld [vmem:[#allocation8 + $0x60] sm:$0xff]
    %v348 = vld [vmem:[#allocation8 + $0x68] sm:$0xf]
    %v349 = vld [vmem:[#allocation8 + $0x6c] sm:$0xff]
    %v350 = vld [vmem:[#allocation8 + $0x74] sm:$0xf]
    %v351 = vld [vmem:[#allocation8 + $0x78] sm:$0xff]
    %v352 = vld [vmem:[#allocation8 + $0x80] sm:$0xf]
    %v353 = vld [vmem:[#allocation8 + $0x84] sm:$0xff]
    %v354 = vld [vmem:[#allocation8 + $0x8c] sm:$0xf]
    %v355 = vld [vmem:[#allocation8 + $0x90] sm:$0xff]
    %v356 = vld [vmem:[#allocation8 + $0x98] sm:$0xf]
    %v357 = vld [vmem:[#allocation8 + $0x9c] sm:$0xff]
    %v358 = vld [vmem:[#allocation8 + $0xa4] sm:$0xf]
    %v359 = vld [vmem:[#allocation8 + $0xa8] sm:$0xff]
    %v360 = vld [vmem:[#allocation8 + $0xb0] sm:$0xf]
    %v361 = vld [vmem:[#allocation8 + $0xb4] sm:$0xff]
    %v362 = vld [vmem:[#allocation8 + $0xbc] sm:$0xf]
    %v363 = vld [vmem:[%s5] sm:$0x7]
    %v396 = vunpack.c.l.b16 %v331
    %v397 = vunpack.c.h.b16 %v331
    %v398 = vunpack.c.l.b16 %v332
    %v399 = vunpack.c.l.b16 %v333
    %v400 = vunpack.c.h.b16 %v333
    %v401 = vunpack.c.l.b16 %v334
    %v402 = vunpack.c.l.b16 %v335
    %v403 = vunpack.c.h.b16 %v335
    %v404 = vunpack.c.l.b16 %v336
    %v405 = vunpack.c.l.b16 %v337
    %v406 = vunpack.c.h.b16 %v337
    %v407 = vunpack.c.l.b16 %v338
    %v408 = vunpack.c.l.b16 %v339
    %v409 = vunpack.c.h.b16 %v339
    %v410 = vunpack.c.l.b16 %v340
    %v411 = vunpack.c.l.b16 %v341
    %v412 = vunpack.c.h.b16 %v341
    %v413 = vunpack.c.l.b16 %v342
    %v414 = vunpack.c.l.b16 %v343
    %v415 = vunpack.c.h.b16 %v343
    %v416 = vunpack.c.l.b16 %v344
    %v417 = vunpack.c.l.b16 %v345
    %v418 = vunpack.c.h.b16 %v345
    %v419 = vunpack.c.l.b16 %v346
    %v420 = vunpack.c.l.b16 %v347
    %v421 = vunpack.c.h.b16 %v347
    %v422 = vunpack.c.l.b16 %v348
    %v423 = vunpack.c.l.b16 %v349
    %v424 = vunpack.c.h.b16 %v349
    %v425 = vunpack.c.l.b16 %v350
    %v426 = vunpack.c.l.b16 %v351
    %v427 = vunpack.c.h.b16 %v351
    %v428 = vunpack.c.l.b16 %v352
    %v429 = vunpack.c.l.b16 %v353
    %v430 = vunpack.c.h.b16 %v353
    %v431 = vunpack.c.l.b16 %v354
    %v432 = vunpack.c.l.b16 %v355
    %v433 = vunpack.c.h.b16 %v355
    %v434 = vunpack.c.l.b16 %v356
    %v435 = vunpack.c.l.b16 %v357
    %v436 = vunpack.c.h.b16 %v357
    %v437 = vunpack.c.l.b16 %v358
    %v438 = vunpack.c.l.b16 %v359
    %v439 = vunpack.c.h.b16 %v359
    %v440 = vunpack.c.l.b16 %v360
    %v441 = vunpack.c.l.b16 %v361
    %v442 = vunpack.c.h.b16 %v361
    %v443 = vunpack.c.l.b16 %v362
    %v444 = vpack.c.b16 %v399, %v396
    %v445 = vpack.c.b16 %v400, %v397
    %v446 = vpack.c.b16 %v401, %v398
    %v447 = vpack.c.b16 %v405, %v402
    %v448 = vpack.c.b16 %v406, %v403
    %v449 = vpack.c.b16 %v407, %v404
    %v450 = vpack.c.b16 %v411, %v408
    %v451 = vpack.c.b16 %v412, %v409
    %v452 = vpack.c.b16 %v413, %v410
    %v453 = vpack.c.b16 %v417, %v414
    %v454 = vpack.c.b16 %v418, %v415
    %v455 = vpack.c.b16 %v419, %v416
    %v456 = vpack.c.b16 %v423, %v420
    %v457 = vpack.c.b16 %v424, %v421
    %v458 = vpack.c.b16 %v425, %v422
    %v459 = vpack.c.b16 %v429, %v426
    %v460 = vpack.c.b16 %v430, %v427
    %v461 = vpack.c.b16 %v431, %v428
    %v462 = vpack.c.b16 %v435, %v432
    %v463 = vpack.c.b16 %v436, %v433
    %v464 = vpack.c.b16 %v437, %v434
    %v465 = vpack.c.b16 %v441, %v438
    %v466 = vpack.c.b16 %v442, %v439
    %v467 = vpack.c.b16 %v443, %v440
    %v493 = vlaneseq
    %v494 = vshrl.u32 %v493, 7
    %v495 = vsub.s32 0, %v494
    %v496 = vrot.slane %v363, %v495
    %v497 = vlaneseq
    %v498 = vshrl.u32 %v497, 7
    %v499 = vsub.s32 1, %v498
    %v500 = vrot.slane %v363, %v499
    %v501 = vlaneseq
    %v502 = vshrl.u32 %v501, 7
    %v503 = vsub.s32 2, %v502
    %v504 = vrot.slane %v363, %v503
    %508 = vmatprep.subr.bf16.mxu0 %v445
    %509 = vmatpush1.bf16.msra.mxu0 %v444
    %510 = vmatprep.subr.bf16.mxu0 %v448
    %511 = vmatpush1.bf16.msra.mxu0 %v447
    %512 = vmatprep.subr.bf16.mxu0 %v451
    %513 = vmatpush1.bf16.msra.mxu0 %v450
    %514 = vmatprep.subr.bf16.mxu0 %v454
    %515 = vmatpush1.bf16.msra.mxu0 %v453
    %516 = vmatprep.subr.bf16.mxu0 %v457
    %517 = vmatpush1.bf16.msra.mxu0 %v456
    %518 = vmatprep.subr.bf16.mxu0 %v460
    %519 = vmatpush1.bf16.msra.mxu0 %v459
    %520 = vmatprep.subr.bf16.mxu0 %v463
    %521 = vmatpush1.bf16.msra.mxu0 %v462
    %522 = vmatprep.subr.bf16.mxu0 %v466
    %523 = vmatpush1.bf16.msra.mxu0 %v465
    %524 = vmatprep.subr.bf16.mxu0 0
    %525 = vmatpush1.bf16.msra.mxu0 0
    %526 = vmatprep.subr.bf16.mxu0 0
    %527 = vmatpush1.bf16.msra.mxu0 0
    %528 = vmatprep.subr.bf16.mxu0 0
    %529 = vmatpush1.bf16.msra.mxu0 0
    %530 = vmatprep.subr.bf16.mxu0 0
    %531 = vmatpush1.bf16.msra.mxu0 0
    %532 = vmatprep.subr.bf16.mxu0 0
    %533 = vmatpush1.bf16.msra.mxu0 0
    %534 = vmatprep.subr.bf16.mxu0 0
    %535 = vmatpush1.bf16.msra.mxu0 0
    %536 = vmatprep.subr.bf16.mxu0 0
    %537 = vmatpush1.bf16.msra.mxu0 0
    %538 = vmatprep.subr.bf16.mxu0 0
    %539 = vmatpush1.bf16.msra.mxu0 0
    %540 = vmatprep.mubr.bf16.mxu0 0
    %541 = vmatmul.mubr.bf16.gmra.mrb[0].mxu0 %v330
    %v542 = vpop.f32.mrb[0].mxu0
    %v543 = vadd.f32 %v496, %v542
    %v544 = vpop.f32.mrb[0].mxu0
    %v545 = vadd.f32 %v500, %v544
    %v546 = vpop.f32.mrb[0].mxu0
    %v547 = vpop.f32.mrb[0].mxu0
    %548 = vdwg.mxu0
    %549 = vmatprep.subr.bf16.mxu0 0
    %550 = vmatpush1.bf16.msra.mxu0 %v446
    %551 = vmatprep.subr.bf16.mxu0 0
    %552 = vmatpush1.bf16.msra.mxu0 %v449
    %553 = vmatprep.subr.bf16.mxu0 0
    %554 = vmatpush1.bf16.msra.mxu0 %v452
    %555 = vmatprep.subr.bf16.mxu0 0
    %556 = vmatpush1.bf16.msra.mxu0 %v455
    %557 = vmatprep.subr.bf16.mxu0 0
    %558 = vmatpush1.bf16.msra.mxu0 %v458
    %559 = vmatprep.subr.bf16.mxu0 0
    %560 = vmatpush1.bf16.msra.mxu0 %v461
    %561 = vmatprep.subr.bf16.mxu0 0
    %562 = vmatpush1.bf16.msra.mxu0 %v464
    %563 = vmatprep.subr.bf16.mxu0 0
    %564 = vmatpush1.bf16.msra.mxu0 %v467
    %565 = vmatprep.subr.bf16.mxu0 0
    %566 = vmatpush1.bf16.msra.mxu0 0
    %567 = vmatprep.subr.bf16.mxu0 0
    %568 = vmatpush1.bf16.msra.mxu0 0
    %569 = vmatprep.subr.bf16.mxu0 0
    %570 = vmatpush1.bf16.msra.mxu0 0
    %571 = vmatprep.subr.bf16.mxu0 0
    %572 = vmatpush1.bf16.msra.mxu0 0
    %573 = vmatprep.subr.bf16.mxu0 0
    %574 = vmatpush1.bf16.msra.mxu0 0
    %575 = vmatprep.subr.bf16.mxu0 0
    %576 = vmatpush1.bf16.msra.mxu0 0
    %577 = vmatprep.subr.bf16.mxu0 0
    %578 = vmatpush1.bf16.msra.mxu0 0
    %579 = vmatprep.subr.bf16.mxu0 0
    %580 = vmatpush1.bf16.msra.mxu0 0
    %581 = vmatprep.mubr.bf16.mxu0 0
    %582 = vmatmul.mubr.bf16.gmra.mrb[0].mxu0 %v330
    %v583 = vpop.f32.mrb[0].mxu0
    %v584 = vadd.f32 %v504, %v583
    %v585 = vpop.f32.mrb[0].mxu0
    %v586 = vpop.f32.mrb[0].mxu0
    %v587 = vpop.f32.mrb[0].mxu0
    %588 = vdwg.mxu0
    %v589 = vadd.f32 %v284, %v543
    %v590 = vxor.u32 %v589, 2147483648
    %v591 = vmul.f32 %v590, 1.442695
    %v592 = vpow.pop %v591
    %v593 = vadd.f32 %v592, 1.0
    %v594 = vrcp.pop %v593
    %v595 = vmul.f32 1.0, %v594
    %v596 = vadd.f32 %v286, %v545
    %v597 = vxor.u32 %v596, 2147483648
    %v598 = vmul.f32 %v597, 1.442695
    %v599 = vpow.pop %v598
    %v600 = vadd.f32 %v599, 1.0
    %v601 = vrcp.pop %v600
    %v602 = vmul.f32 1.0, %v601
    %v603 = vmul.f32 %v595, %v584
    %v604 = vadd.f32 %v325, %v603
    %v605 = vtanh.pop %v604
    %v606 = vsub.f32 1.0, %v602
    %v607 = vmul.f32 %v606, %v605
    %v608 = vmul.f32 %v602, %v70
    %v609 = vadd.f32 %v607, %v608
    %610 = vst [vmem:[#allocation9] sm:$0x1] %v609
    %611 = vst [vmem:[#allocation2] sm:$0x1] %v609
    // Predicated region
    $region42: #{_decoder_pallas.1} parent=1 // pred_check
      _
    $region43: #{_decoder_pallas.1} parent=1 // pred_check_branch
      %613 = sbr.rel (0) target = $region45
    $region44: #{_decoder_pallas.1} parent=1 // pred_region
      %s615 = ssub.s32 16, 16
      %616 = vsyncadd [#allocation5], %s615
      %s618 = sshll.u32 [#allocation9], 4
      %s619 = int_to_ptr.vmem [resolvable:$true] %s618
      %621 = dma.vmem_to_hbm [thread:$0]  %s619, 16, %s6, [#allocation5]
    $region45: #{_decoder_pallas.1} parent=1 // pred_fallthru
      _
    // Predicated region
    $region46: #{_decoder_pallas.1} parent=1 // pred_check
      _
    $region47: #{_decoder_pallas.1} parent=1 // pred_check_branch
      %623 = sbr.rel (0) target = $region49
    $region48: #{_decoder_pallas.1} parent=1 // pred_region
      %624 = dma.done [#allocation5], 16
    $region49: #{_decoder_pallas.1} parent=1 // pred_fallthru
      _
    %625 = vsyncpa [#allocation4], 1
    %626 = vsyncpa [#allocation7], 1
    %627 = vsyncpa [#allocation5], 1

</llo_original>
